<compile_context>
chip_gen: v7x
topology: tpu7x:2x2x1
jax: 0.10.0
libtpu: 0.0.40
codegen_flags: <defaults>
</compile_context>

<pallas_src>
import functools

import jax
import jax.numpy as jnp
from jax.experimental import pallas as pl
from jax.experimental.pallas import tpu as pltpu

LN_EPS = 1e-5


def _conv_kernel(x_ref, w1a_ref, w1b_ref, w2_ref, prm_ref, out_ref, dw_scr,
                 *, K, halo, t_valid):
    bblk, T, C = x_ref.shape          # T is the (possibly padded) sequence length
    pad = K // 2
    M = bblk * T

    # ---- packed per-channel params: rows [0:K]=dw taps, then bdw,b1a,b1b,gamma,beta,b2 ----
    dwv = prm_ref[0:K, :]             # (K, C) depthwise taps, hoisted once
    bdw = prm_ref[K, :]
    b1a = prm_ref[K + 1, :]
    b1b = prm_ref[K + 2, :]
    gamma = prm_ref[K + 3, :]
    beta = prm_ref[K + 4, :]
    b2 = prm_ref[K + 5, :]

    # ---- pointwise_conv1 (k=1) + GLU; ada scale/bias pre-folded into w1a/w1b/b1a/b1b ----
    x = x_ref[...].reshape(M, C)                                   # already bf16
    a = jnp.dot(x, w1a_ref[...], preferred_element_type=jnp.float32) + b1a
    b = jnp.dot(x, w1b_ref[...], preferred_element_type=jnp.float32) + b1b
    g = (a * jax.nn.sigmoid(b)).reshape(bblk, T, C)                # (bblk, T, C) f32

    if t_valid < T:
        # Wrapper padded T up to a multiple of 8; zero the padded tail of g so the
        # depthwise 'same' zero-padding stays exact for rows near the real boundary.
        t_idx = jax.lax.broadcasted_iota(jnp.int32, (bblk, T, C), 1)
        g = jnp.where(t_idx < t_valid, g, 0.0)

    # ---- depthwise conv (k=K, 'same', groups=C) via sublane-aligned padded scratch ----
    # Halos are zeroed every step (cheap aligned full-tile stores). Do NOT guard with
    # program_id==0: scratch is per-core, and under megacore sharding the second core
    # never runs step 0, which would leave its halo uninitialized.
    bot = dw_scr.shape[1] - halo - T
    dw_scr[:, :halo, :] = jnp.zeros((bblk, halo, C), jnp.float32)          # top halo
    dw_scr[:, halo + T:, :] = jnp.zeros((bblk, bot, C), jnp.float32)       # bottom halo
    dw_scr[:, halo:halo + T, :] = g                                        # aligned main store

    acc = jnp.zeros((bblk, T, C), jnp.float32)
    base = halo - pad
    for k in range(K):                 # static unrolled; each tap is a shifted vector load
        acc = acc + dw_scr[:, base + k:base + k + T, :] * dwv[k]
    y = (acc + bdw).reshape(M, C)

    # ---- LayerNorm over channels + ReLU (f32 on the VPU) ----
    mean = jnp.mean(y, axis=-1, keepdims=True)
    yc = y - mean
    var = jnp.mean(yc * yc, axis=-1, keepdims=True)
    yn = yc * jax.lax.rsqrt(var + LN_EPS)
    act = jnp.maximum(yn * gamma + beta, 0.0)

    # ---- pointwise_conv2 (k=1) ----
    out = jnp.dot(act.astype(jnp.bfloat16), w2_ref[...],
                  preferred_element_type=jnp.float32) + b2
    out_ref[...] = out.reshape(bblk, T, C).astype(out_ref.dtype)


def _vmem_bytes(bblk, T_pad, C, P, scr_rows, out_itemsize):
    """Explicit per-step VMEM estimate (double-buffered blocks + live intermediates)."""
    slab = bblk * T_pad * C
    return (2 * slab * 2                  # x block, bf16, double-buffered
            + 2 * slab * out_itemsize     # out block, double-buffered
            + bblk * scr_rows * C * 4     # depthwise scratch (f32)
            + 6 * slab * 4                # live f32 intermediates (a, b, g, acc, y, act)
            + 2 * 3 * C * C * 2           # w1a/w1b/w2 bf16, double-buffered
            + 2 * P * C * 4)              # packed per-channel params, double-buffered


def _pick_bblk(B, T_pad, C, P, scr_rows, out_itemsize, budget=24 << 20):
    """Largest divisor of B fitting the VMEM budget; keep >=2 grid steps when B >= 2
    so v7x's second TensorCore gets work (negligible cost on 1-TC chips)."""
    min_steps = 2 if B >= 2 else 1
    best = 1
    for cand in range(1, B + 1):
        if B % cand:
            continue
        if B // cand < min_steps:
            continue
        if _vmem_bytes(cand, T_pad, C, P, scr_rows, out_itemsize) <= budget:
            best = cand
    return best


def conv_module_forward(x, kparams, bblk=None, out_dtype=None):
    """x: (B, T, C) float32. kparams from prepare_kernel_params. Returns (B, T, C)."""
    B, T, C = x.shape
    w1a, w1b, w2, prm, K = kparams
    pad = K // 2
    if out_dtype is None:
        out_dtype = x.dtype   # bf16 here would further halve HBM writeback if tolerated
    out_isize = jnp.dtype(out_dtype).itemsize

    # Pad T to a multiple of 8 so (bblk, T, C) -> (bblk*T, C) stays layout-preserving;
    # the kernel masks the padded tail of the GLU output, so 'same' padding is exact.
    T_pad = -(-T // 8) * 8
    xb = x.astype(jnp.bfloat16)                    # bf16 MXU LHS: half the HBM/VMEM bytes
    if T_pad != T:
        xb = jnp.pad(xb, ((0, 0), (0, T_pad - T), (0, 0)))

    halo = -(-pad // 8) * 8                        # sublane-aligned halo (7 -> 8 rows)
    scr_rows = halo + T_pad + halo

    if bblk is None:
        bblk = _pick_bblk(B, T_pad, C, prm.shape[0], scr_rows, out_isize)
    assert B % bblk == 0

    est = _vmem_bytes(bblk, T_pad, C, prm.shape[0], scr_rows, out_isize)
    vmem_limit = min(max(int(est * 1.5), 32 << 20), 48 << 20)

    kernel = functools.partial(_conv_kernel, K=K, halo=halo, t_valid=T)
    full = lambda arr: pl.BlockSpec(arr.shape, lambda i: (0,) * arr.ndim)

    out = pl.pallas_call(
        kernel,
        out_shape=jax.ShapeDtypeStruct((B, T_pad, C), out_dtype),
        grid=(B // bblk,),
        in_specs=[
            pl.BlockSpec((bblk, T_pad, C), lambda i: (i, 0, 0)),   # x (bf16)
            full(w1a), full(w1b), full(w2),                        # bf16 matmul weights
            full(prm),                                             # packed per-channel params
        ],
        out_specs=pl.BlockSpec((bblk, T_pad, C), lambda i: (i, 0, 0)),
        scratch_shapes=[pltpu.VMEM((bblk, scr_rows, C), jnp.float32)],
        compiler_params=pltpu.CompilerParams(
            # batch axis carries no state -> parallel (megacore sharding on v7x)
            dimension_semantics=("parallel",),
            vmem_limit_bytes=vmem_limit),
    )(xb, w1a, w1b, w2, prm)

    if T_pad != T:
        out = out[:, :T, :]
    return out


def make_torch_params(key, channels, kernel_size):
    """Parameters in the PyTorch module's native (squeezed) shapes/layout."""
    C, K = channels, kernel_size
    ks = jax.random.split(key, 8)
    ada_s = 1.0 + 0.1 * jax.random.normal(ks[0], (C,), jnp.float32)   # ada_scale (1,1,C)
    ada_b = 0.1 * jax.random.normal(ks[1], (C,), jnp.float32)         # ada_bias  (1,1,C)
    w1 = 0.1 * jax.random.normal(ks[2], (2 * C, C), jnp.float32)      # (2C, C, 1) squeezed
    b1 = 0.1 * jax.random.normal(ks[3], (2 * C,), jnp.float32)
    dw = 0.1 * jax.random.normal(ks[4], (C, K), jnp.float32)          # (C, 1, K) squeezed
    bdw = 0.1 * jax.random.normal(ks[5], (C,), jnp.float32)
    gamma = jnp.ones((C,), jnp.float32)                               # norm.weight
    beta = jnp.zeros((C,), jnp.float32)                               # norm.bias
    w2 = 0.1 * jax.random.normal(ks[6], (C, C), jnp.float32)          # (C, C, 1) squeezed
    b2 = 0.1 * jax.random.normal(ks[7], (C,), jnp.float32)
    return (ada_s, ada_b, w1, b1, dw, bdw, gamma, beta, w2, b2)


def prepare_kernel_params(tparams):
    """One-time host-side repack: fold ada into conv1, split GLU halves, bf16 weights,
    and pack all small per-channel operands into a single (P, C) f32 slab."""
    (ada_s, ada_b, w1_pt, b1, dw_pt, bdw, gamma, beta, w2_pt, b2) = tparams
    C = w2_pt.shape[0]
    K = dw_pt.shape[1]
    W1 = w1_pt.T                               # (C, 2C): x @ W1 == Conv1d(k=1)
    W1f = ada_s[:, None] * W1                  # fold ada_scale:  (x*s) @ W1
    b1f = b1 + ada_b @ W1                      # fold ada_bias:   b @ W1
    w1a = W1f[:, :C].astype(jnp.bfloat16)
    w1b = W1f[:, C:].astype(jnp.bfloat16)
    w2 = w2_pt.T.astype(jnp.bfloat16)

    # Packed per-channel params: rows [0:K] = dw taps, then bdw, b1a, b1b, gamma, beta, b2.
    prm = jnp.concatenate(
        [dw_pt.T,                              # (K, C)
         bdw.reshape(1, C),
         b1f[:C].reshape(1, C),
         b1f[C:].reshape(1, C),
         gamma.reshape(1, C),
         beta.reshape(1, C),
         b2.reshape(1, C)], axis=0).astype(jnp.float32)
    P = prm.shape[0]
    P_pad = -(-P // 8) * 8                     # pad rows to a sublane multiple
    if P_pad != P:
        prm = jnp.pad(prm, ((0, P_pad - P), (0, 0)))
    return (w1a, w1b, w2, prm, K)


def reference_forward(x, tparams):
    """Pure-JAX f32 reference mirroring the PyTorch forward (channels-last)."""
    (ada_s, ada_b, w1_pt, b1, dw_pt, bdw, gamma, beta, w2_pt, b2) = tparams
    B, T, C = x.shape
    K = dw_pt.shape[1]
    pad = K // 2
    x = x * ada_s + ada_b
    h = jnp.einsum("btc,oc->bto", x, w1_pt) + b1
    a, g = h[..., :C], h[..., C:]
    z = a * jax.nn.sigmoid(g)
    zp = jnp.pad(z, ((0, 0), (pad, pad), (0, 0)))
    y = sum(zp[:, k:k + T, :] * dw_pt[:, k] for k in range(K)) + bdw
    mean = jnp.mean(y, axis=-1, keepdims=True)
    var = jnp.mean((y - mean) ** 2, axis=-1, keepdims=True)
    yn = (y - mean) / jnp.sqrt(var + LN_EPS) * gamma + beta
    act = jnp.maximum(yn, 0.0)
    return jnp.einsum("btc,oc->bto", act, w2_pt) + b2


if __name__ == "__main__":
    B, T, C, K = 2, 16, 32, 15
    key = jax.random.PRNGKey(0)
    kx, kp = jax.random.split(key)
    x = jax.random.normal(kx, (B, T, C), jnp.float32)

    tparams = make_torch_params(kp, C, K)       # PyTorch-layout params (f32)
    kparams = prepare_kernel_params(tparams)    # folded / split / packed kernel params

    out = conv_module_forward(x, kparams)
    out = jax.block_until_ready(out)

    ref = reference_forward(x, tparams)
    assert out.shape == (B, T, C)
    max_err = float(jnp.max(jnp.abs(out - ref)))
    # bf16 MXU inputs with f32 accumulation -> small, bounded error vs the f32 reference.
    assert jnp.allclose(out, ref, atol=2e-2, rtol=2e-2), f"mismatch vs reference, max_err={max_err}"
    print("KERNEL_OK")
</pallas_src>

<mosaic_0001>
module attributes {stable_mosaic.version = 11 : i64} {
  func.func @_conv_kernel(%arg0: i32, %arg1: memref<1x16x32xbf16, #tpu.memory_space<vmem>>, %arg2: memref<32x32xbf16, #tpu.memory_space<vmem>>, %arg3: memref<32x32xbf16, #tpu.memory_space<vmem>>, %arg4: memref<32x32xbf16, #tpu.memory_space<vmem>>, %arg5: memref<24x32xf32, #tpu.memory_space<vmem>>, %arg6: memref<1x16x32xf32, #tpu.memory_space<vmem>>, %arg7: memref<1x32x32xf32, #tpu.memory_space<vmem>>) attributes {dimension_semantics = [#tpu.dimension_semantics<parallel>], iteration_bounds = array<i64: 2>, scalar_prefetch = 0 : i64, scratch_operands = 1 : i64, tpu.core_type = #tpu.core_type<tc>, window_params = [{transform_indices = @transform_0, window_bounds = array<i64: 1, 16, 32>}, {pipeline_mode = #tpu.pipeline_mode<synchronous>, transform_indices = @transform_1, window_bounds = array<i64: 32, 32>}, {pipeline_mode = #tpu.pipeline_mode<synchronous>, transform_indices = @transform_2, window_bounds = array<i64: 32, 32>}, {pipeline_mode = #tpu.pipeline_mode<synchronous>, transform_indices = @transform_3, window_bounds = array<i64: 32, 32>}, {pipeline_mode = #tpu.pipeline_mode<synchronous>, transform_indices = @transform_4, window_bounds = array<i64: 24, 32>}, {transform_indices = @transform_5, window_bounds = array<i64: 1, 16, 32>}]} {
    %c0 = arith.constant 0 : index
    %c0_0 = arith.constant 0 : index
    %0 = vector.load %arg5[%c0, %c0_0] : memref<24x32xf32, #tpu.memory_space<vmem>>, vector<15x32xf32>
    %c15 = arith.constant 15 : index
    %c0_1 = arith.constant 0 : index
    %1 = vector.load %arg5[%c15, %c0_1] : memref<24x32xf32, #tpu.memory_space<vmem>>, vector<1x32xf32>
    %2 = vector.shape_cast %1 : vector<1x32xf32> to vector<32xf32>
    %c16 = arith.constant 16 : index
    %c0_2 = arith.constant 0 : index
    %3 = vector.load %arg5[%c16, %c0_2] : memref<24x32xf32, #tpu.memory_space<vmem>>, vector<1x32xf32>
    %4 = vector.shape_cast %3 : vector<1x32xf32> to vector<32xf32>
    %c17 = arith.constant 17 : index
    %c0_3 = arith.constant 0 : index
    %5 = vector.load %arg5[%c17, %c0_3] : memref<24x32xf32, #tpu.memory_space<vmem>>, vector<1x32xf32>
    %6 = vector.shape_cast %5 : vector<1x32xf32> to vector<32xf32>
    %c18 = arith.constant 18 : index
    %c0_4 = arith.constant 0 : index
    %7 = vector.load %arg5[%c18, %c0_4] : memref<24x32xf32, #tpu.memory_space<vmem>>, vector<1x32xf32>
    %8 = vector.shape_cast %7 : vector<1x32xf32> to vector<32xf32>
    %c19 = arith.constant 19 : index
    %c0_5 = arith.constant 0 : index
    %9 = vector.load %arg5[%c19, %c0_5] : memref<24x32xf32, #tpu.memory_space<vmem>>, vector<1x32xf32>
    %10 = vector.shape_cast %9 : vector<1x32xf32> to vector<32xf32>
    %c20 = arith.constant 20 : index
    %c0_6 = arith.constant 0 : index
    %11 = vector.load %arg5[%c20, %c0_6] : memref<24x32xf32, #tpu.memory_space<vmem>>, vector<1x32xf32>
    %12 = vector.shape_cast %11 : vector<1x32xf32> to vector<32xf32>
    %c0_7 = arith.constant 0 : index
    %c0_8 = arith.constant 0 : index
    %c0_9 = arith.constant 0 : index
    %13 = vector.load %arg1[%c0_7, %c0_8, %c0_9] : memref<1x16x32xbf16, #tpu.memory_space<vmem>>, vector<1x16x32xbf16>
    %14 = vector.shape_cast %13 : vector<1x16x32xbf16> to vector<16x32xbf16>
    %c0_10 = arith.constant 0 : index
    %c0_11 = arith.constant 0 : index
    %15 = vector.load %arg2[%c0_10, %c0_11] : memref<32x32xbf16, #tpu.memory_space<vmem>>, vector<32x32xbf16>
    %cst = arith.constant dense<0.000000e+00> : vector<16x32xf32>
    %16 = tpu.matmul %14, %15, %cst {dimension_numbers = #tpu.dot_dimension_numbers<[1], [0], [0], [1], [0, 0, 1, 1], [], []>} : vector<16x32xbf16>, vector<32x32xbf16>, vector<16x32xf32> -> vector<16x32xf32>
    %17 = vector.shape_cast %4 : vector<32xf32> to vector<1x32xf32>
    %18 = vector.broadcast %17 : vector<1x32xf32> to vector<16x32xf32>
    %19 = arith.addf %16, %18 : vector<16x32xf32>
    %c0_12 = arith.constant 0 : index
    %c0_13 = arith.constant 0 : index
    %20 = vector.load %arg3[%c0_12, %c0_13] : memref<32x32xbf16, #tpu.memory_space<vmem>>, vector<32x32xbf16>
    %cst_14 = arith.constant dense<0.000000e+00> : vector<16x32xf32>
    %21 = tpu.matmul %14, %20, %cst_14 {dimension_numbers = #tpu.dot_dimension_numbers<[1], [0], [0], [1], [0, 0, 1, 1], [], []>} : vector<16x32xbf16>, vector<32x32xbf16>, vector<16x32xf32> -> vector<16x32xf32>
    %22 = vector.shape_cast %6 : vector<32xf32> to vector<1x32xf32>
    %23 = vector.broadcast %22 : vector<1x32xf32> to vector<16x32xf32>
    %24 = arith.addf %21, %23 : vector<16x32xf32>
    %25 = arith.negf %24 : vector<16x32xf32>
    %26 = math.exp %25 : vector<16x32xf32>
    %cst_15 = arith.constant 1.000000e+00 : f32
    %27 = vector.broadcast %cst_15 : f32 to vector<16x32xf32>
    %28 = arith.addf %27, %26 : vector<16x32xf32>
    %29 = arith.divf %27, %28 : vector<16x32xf32>
    %30 = arith.mulf %19, %29 : vector<16x32xf32>
    %31 = vector.shape_cast %30 : vector<16x32xf32> to vector<1x16x32xf32>
    %cst_16 = arith.constant 0.000000e+00 : f32
    %32 = vector.broadcast %cst_16 : f32 to vector<1x8x32xf32>
    %c0_17 = arith.constant 0 : index
    %c0_18 = arith.constant 0 : index
    %c0_19 = arith.constant 0 : index
    %33 = vector.load %arg7[%c0_17, %c0_18, %c0_19] : memref<1x32x32xf32, #tpu.memory_space<vmem>>, vector<1x8x32xf32>
    tpu.vector_store %arg7[%c0_17, %c0_18, %c0_19], %32 {strides = array<i32>} : memref<1x32x32xf32, #tpu.memory_space<vmem>>, vector<1x8x32xf32>,
    %cst_20 = arith.constant 0.000000e+00 : f32
    %34 = vector.broadcast %cst_20 : f32 to vector<1x8x32xf32>
    %c0_21 = arith.constant 0 : index
    %c24 = arith.constant 24 : index
    %c0_22 = arith.constant 0 : index
    %35 = vector.load %arg7[%c0_21, %c24, %c0_22] : memref<1x32x32xf32, #tpu.memory_space<vmem>>, vector<1x8x32xf32>
    tpu.vector_store %arg7[%c0_21, %c24, %c0_22], %34 {strides = array<i32>} : memref<1x32x32xf32, #tpu.memory_space<vmem>>, vector<1x8x32xf32>,
    %c0_23 = arith.constant 0 : index
    %c8 = arith.constant 8 : index
    %c0_24 = arith.constant 0 : index
    %36 = vector.load %arg7[%c0_23, %c8, %c0_24] : memref<1x32x32xf32, #tpu.memory_space<vmem>>, vector<1x16x32xf32>
    tpu.vector_store %arg7[%c0_23, %c8, %c0_24], %31 {strides = array<i32>} : memref<1x32x32xf32, #tpu.memory_space<vmem>>, vector<1x16x32xf32>,
    %cst_25 = arith.constant 0.000000e+00 : f32
    %37 = vector.broadcast %cst_25 : f32 to vector<1x16x32xf32>
    %c0_26 = arith.constant 0 : index
    %c1 = arith.constant 1 : index
    %c0_27 = arith.constant 0 : index
    %38 = vector.load %arg7[%c0_26, %c1, %c0_27] : memref<1x32x32xf32, #tpu.memory_space<vmem>>, vector<1x16x32xf32>
    %39 = vector.extract_strided_slice %0 {offsets = [0, 0], sizes = [1, 32], strides = [1, 1]} : vector<15x32xf32> to vector<1x32xf32>
    %40 = vector.shape_cast %39 : vector<1x32xf32> to vector<32xf32>
    %41 = vector.shape_cast %40 : vector<32xf32> to vector<1x1x32xf32>
    %42 = vector.broadcast %41 : vector<1x1x32xf32> to vector<1x16x32xf32>
    %43 = arith.mulf %38, %42 : vector<1x16x32xf32>
    %44 = arith.addf %37, %43 : vector<1x16x32xf32>
    %c0_28 = arith.constant 0 : index
    %c2 = arith.constant 2 : index
    %c0_29 = arith.constant 0 : index
    %45 = vector.load %arg7[%c0_28, %c2, %c0_29] : memref<1x32x32xf32, #tpu.memory_space<vmem>>, vector<1x16x32xf32>
    %46 = vector.extract_strided_slice %0 {offsets = [1, 0], sizes = [1, 32], strides = [1, 1]} : vector<15x32xf32> to vector<1x32xf32>
    %47 = vector.shape_cast %46 : vector<1x32xf32> to vector<32xf32>
    %48 = vector.shape_cast %47 : vector<32xf32> to vector<1x1x32xf32>
    %49 = vector.broadcast %48 : vector<1x1x32xf32> to vector<1x16x32xf32>
    %50 = arith.mulf %45, %49 : vector<1x16x32xf32>
    %51 = arith.addf %44, %50 : vector<1x16x32xf32>
    %c0_30 = arith.constant 0 : index
    %c3 = arith.constant 3 : index
    %c0_31 = arith.constant 0 : index
    %52 = vector.load %arg7[%c0_30, %c3, %c0_31] : memref<1x32x32xf32, #tpu.memory_space<vmem>>, vector<1x16x32xf32>
    %53 = vector.extract_strided_slice %0 {offsets = [2, 0], sizes = [1, 32], strides = [1, 1]} : vector<15x32xf32> to vector<1x32xf32>
    %54 = vector.shape_cast %53 : vector<1x32xf32> to vector<32xf32>
    %55 = vector.shape_cast %54 : vector<32xf32> to vector<1x1x32xf32>
    %56 = vector.broadcast %55 : vector<1x1x32xf32> to vector<1x16x32xf32>
    %57 = arith.mulf %52, %56 : vector<1x16x32xf32>
    %58 = arith.addf %51, %57 : vector<1x16x32xf32>
    %c0_32 = arith.constant 0 : index
    %c4 = arith.constant 4 : index
    %c0_33 = arith.constant 0 : index
    %59 = vector.load %arg7[%c0_32, %c4, %c0_33] : memref<1x32x32xf32, #tpu.memory_space<vmem>>, vector<1x16x32xf32>
    %60 = vector.extract_strided_slice %0 {offsets = [3, 0], sizes = [1, 32], strides = [1, 1]} : vector<15x32xf32> to vector<1x32xf32>
    %61 = vector.shape_cast %60 : vector<1x32xf32> to vector<32xf32>
    %62 = vector.shape_cast %61 : vector<32xf32> to vector<1x1x32xf32>
    %63 = vector.broadcast %62 : vector<1x1x32xf32> to vector<1x16x32xf32>
    %64 = arith.mulf %59, %63 : vector<1x16x32xf32>
    %65 = arith.addf %58, %64 : vector<1x16x32xf32>
    %c0_34 = arith.constant 0 : index
    %c5 = arith.constant 5 : index
    %c0_35 = arith.constant 0 : index
    %66 = vector.load %arg7[%c0_34, %c5, %c0_35] : memref<1x32x32xf32, #tpu.memory_space<vmem>>, vector<1x16x32xf32>
    %67 = vector.extract_strided_slice %0 {offsets = [4, 0], sizes = [1, 32], strides = [1, 1]} : vector<15x32xf32> to vector<1x32xf32>
    %68 = vector.shape_cast %67 : vector<1x32xf32> to vector<32xf32>
    %69 = vector.shape_cast %68 : vector<32xf32> to vector<1x1x32xf32>
    %70 = vector.broadcast %69 : vector<1x1x32xf32> to vector<1x16x32xf32>
    %71 = arith.mulf %66, %70 : vector<1x16x32xf32>
    %72 = arith.addf %65, %71 : vector<1x16x32xf32>
    %c0_36 = arith.constant 0 : index
    %c6 = arith.constant 6 : index
    %c0_37 = arith.constant 0 : index
    %73 = vector.load %arg7[%c0_36, %c6, %c0_37] : memref<1x32x32xf32, #tpu.memory_space<vmem>>, vector<1x16x32xf32>
    %74 = vector.extract_strided_slice %0 {offsets = [5, 0], sizes = [1, 32], strides = [1, 1]} : vector<15x32xf32> to vector<1x32xf32>
    %75 = vector.shape_cast %74 : vector<1x32xf32> to vector<32xf32>
    %76 = vector.shape_cast %75 : vector<32xf32> to vector<1x1x32xf32>
    %77 = vector.broadcast %76 : vector<1x1x32xf32> to vector<1x16x32xf32>
    %78 = arith.mulf %73, %77 : vector<1x16x32xf32>
    %79 = arith.addf %72, %78 : vector<1x16x32xf32>
    %c0_38 = arith.constant 0 : index
    %c7 = arith.constant 7 : index
    %c0_39 = arith.constant 0 : index
    %80 = vector.load %arg7[%c0_38, %c7, %c0_39] : memref<1x32x32xf32, #tpu.memory_space<vmem>>, vector<1x16x32xf32>
    %81 = vector.extract_strided_slice %0 {offsets = [6, 0], sizes = [1, 32], strides = [1, 1]} : vector<15x32xf32> to vector<1x32xf32>
    %82 = vector.shape_cast %81 : vector<1x32xf32> to vector<32xf32>
    %83 = vector.shape_cast %82 : vector<32xf32> to vector<1x1x32xf32>
    %84 = vector.broadcast %83 : vector<1x1x32xf32> to vector<1x16x32xf32>
    %85 = arith.mulf %80, %84 : vector<1x16x32xf32>
    %86 = arith.addf %79, %85 : vector<1x16x32xf32>
    %c0_40 = arith.constant 0 : index
    %c8_41 = arith.constant 8 : index
    %c0_42 = arith.constant 0 : index
    %87 = vector.load %arg7[%c0_40, %c8_41, %c0_42] : memref<1x32x32xf32, #tpu.memory_space<vmem>>, vector<1x16x32xf32>
    %88 = vector.extract_strided_slice %0 {offsets = [7, 0], sizes = [1, 32], strides = [1, 1]} : vector<15x32xf32> to vector<1x32xf32>
    %89 = vector.shape_cast %88 : vector<1x32xf32> to vector<32xf32>
    %90 = vector.shape_cast %89 : vector<32xf32> to vector<1x1x32xf32>
    %91 = vector.broadcast %90 : vector<1x1x32xf32> to vector<1x16x32xf32>
    %92 = arith.mulf %87, %91 : vector<1x16x32xf32>
    %93 = arith.addf %86, %92 : vector<1x16x32xf32>
    %c0_43 = arith.constant 0 : index
    %c9 = arith.constant 9 : index
    %c0_44 = arith.constant 0 : index
    %94 = vector.load %arg7[%c0_43, %c9, %c0_44] : memref<1x32x32xf32, #tpu.memory_space<vmem>>, vector<1x16x32xf32>
    %95 = vector.extract_strided_slice %0 {offsets = [8, 0], sizes = [1, 32], strides = [1, 1]} : vector<15x32xf32> to vector<1x32xf32>
    %96 = vector.shape_cast %95 : vector<1x32xf32> to vector<32xf32>
    %97 = vector.shape_cast %96 : vector<32xf32> to vector<1x1x32xf32>
    %98 = vector.broadcast %97 : vector<1x1x32xf32> to vector<1x16x32xf32>
    %99 = arith.mulf %94, %98 : vector<1x16x32xf32>
    %100 = arith.addf %93, %99 : vector<1x16x32xf32>
    %c0_45 = arith.constant 0 : index
    %c10 = arith.constant 10 : index
    %c0_46 = arith.constant 0 : index
    %101 = vector.load %arg7[%c0_45, %c10, %c0_46] : memref<1x32x32xf32, #tpu.memory_space<vmem>>, vector<1x16x32xf32>
    %102 = vector.extract_strided_slice %0 {offsets = [9, 0], sizes = [1, 32], strides = [1, 1]} : vector<15x32xf32> to vector<1x32xf32>
    %103 = vector.shape_cast %102 : vector<1x32xf32> to vector<32xf32>
    %104 = vector.shape_cast %103 : vector<32xf32> to vector<1x1x32xf32>
    %105 = vector.broadcast %104 : vector<1x1x32xf32> to vector<1x16x32xf32>
    %106 = arith.mulf %101, %105 : vector<1x16x32xf32>
    %107 = arith.addf %100, %106 : vector<1x16x32xf32>
    %c0_47 = arith.constant 0 : index
    %c11 = arith.constant 11 : index
    %c0_48 = arith.constant 0 : index
    %108 = vector.load %arg7[%c0_47, %c11, %c0_48] : memref<1x32x32xf32, #tpu.memory_space<vmem>>, vector<1x16x32xf32>
    %109 = vector.extract_strided_slice %0 {offsets = [10, 0], sizes = [1, 32], strides = [1, 1]} : vector<15x32xf32> to vector<1x32xf32>
    %110 = vector.shape_cast %109 : vector<1x32xf32> to vector<32xf32>
    %111 = vector.shape_cast %110 : vector<32xf32> to vector<1x1x32xf32>
    %112 = vector.broadcast %111 : vector<1x1x32xf32> to vector<1x16x32xf32>
    %113 = arith.mulf %108, %112 : vector<1x16x32xf32>
    %114 = arith.addf %107, %113 : vector<1x16x32xf32>
    %c0_49 = arith.constant 0 : index
    %c12 = arith.constant 12 : index
    %c0_50 = arith.constant 0 : index
    %115 = vector.load %arg7[%c0_49, %c12, %c0_50] : memref<1x32x32xf32, #tpu.memory_space<vmem>>, vector<1x16x32xf32>
    %116 = vector.extract_strided_slice %0 {offsets = [11, 0], sizes = [1, 32], strides = [1, 1]} : vector<15x32xf32> to vector<1x32xf32>
    %117 = vector.shape_cast %116 : vector<1x32xf32> to vector<32xf32>
    %118 = vector.shape_cast %117 : vector<32xf32> to vector<1x1x32xf32>
    %119 = vector.broadcast %118 : vector<1x1x32xf32> to vector<1x16x32xf32>
    %120 = arith.mulf %115, %119 : vector<1x16x32xf32>
    %121 = arith.addf %114, %120 : vector<1x16x32xf32>
    %c0_51 = arith.constant 0 : index
    %c13 = arith.constant 13 : index
    %c0_52 = arith.constant 0 : index
    %122 = vector.load %arg7[%c0_51, %c13, %c0_52] : memref<1x32x32xf32, #tpu.memory_space<vmem>>, vector<1x16x32xf32>
    %123 = vector.extract_strided_slice %0 {offsets = [12, 0], sizes = [1, 32], strides = [1, 1]} : vector<15x32xf32> to vector<1x32xf32>
    %124 = vector.shape_cast %123 : vector<1x32xf32> to vector<32xf32>
    %125 = vector.shape_cast %124 : vector<32xf32> to vector<1x1x32xf32>
    %126 = vector.broadcast %125 : vector<1x1x32xf32> to vector<1x16x32xf32>
    %127 = arith.mulf %122, %126 : vector<1x16x32xf32>
    %128 = arith.addf %121, %127 : vector<1x16x32xf32>
    %c0_53 = arith.constant 0 : index
    %c14 = arith.constant 14 : index
    %c0_54 = arith.constant 0 : index
    %129 = vector.load %arg7[%c0_53, %c14, %c0_54] : memref<1x32x32xf32, #tpu.memory_space<vmem>>, vector<1x16x32xf32>
    %130 = vector.extract_strided_slice %0 {offsets = [13, 0], sizes = [1, 32], strides = [1, 1]} : vector<15x32xf32> to vector<1x32xf32>
    %131 = vector.shape_cast %130 : vector<1x32xf32> to vector<32xf32>
    %132 = vector.shape_cast %131 : vector<32xf32> to vector<1x1x32xf32>
    %133 = vector.broadcast %132 : vector<1x1x32xf32> to vector<1x16x32xf32>
    %134 = arith.mulf %129, %133 : vector<1x16x32xf32>
    %135 = arith.addf %128, %134 : vector<1x16x32xf32>
    %c0_55 = arith.constant 0 : index
    %c15_56 = arith.constant 15 : index
    %c0_57 = arith.constant 0 : index
    %136 = vector.load %arg7[%c0_55, %c15_56, %c0_57] : memref<1x32x32xf32, #tpu.memory_space<vmem>>, vector<1x16x32xf32>
    %137 = vector.extract_strided_slice %0 {offsets = [14, 0], sizes = [1, 32], strides = [1, 1]} : vector<15x32xf32> to vector<1x32xf32>
    %138 = vector.shape_cast %137 : vector<1x32xf32> to vector<32xf32>
    %139 = vector.shape_cast %138 : vector<32xf32> to vector<1x1x32xf32>
    %140 = vector.broadcast %139 : vector<1x1x32xf32> to vector<1x16x32xf32>
    %141 = arith.mulf %136, %140 : vector<1x16x32xf32>
    %142 = arith.addf %135, %141 : vector<1x16x32xf32>
    %143 = vector.shape_cast %2 : vector<32xf32> to vector<1x1x32xf32>
    %144 = vector.broadcast %143 : vector<1x1x32xf32> to vector<1x16x32xf32>
    %145 = arith.addf %142, %144 : vector<1x16x32xf32>
    %146 = vector.shape_cast %145 : vector<1x16x32xf32> to vector<16x32xf32>
    %cst_58 = arith.constant dense<0.000000e+00> : vector<16xf32>
    %147 = vector.multi_reduction <add>, %146, %cst_58 [1] : vector<16x32xf32> to vector<16xf32>
    %148 = vector.shape_cast %147 : vector<16xf32> to vector<16x1xf32>
    %cst_59 = arith.constant 3.200000e+01 : f32
    %149 = vector.broadcast %cst_59 : f32 to vector<16x1xf32>
    %150 = arith.divf %148, %149 : vector<16x1xf32>
    %151 = vector.broadcast %150 : vector<16x1xf32> to vector<16x32xf32>
    %152 = arith.subf %146, %151 : vector<16x32xf32>
    %153 = arith.mulf %152, %152 : vector<16x32xf32>
    %cst_60 = arith.constant dense<0.000000e+00> : vector<16xf32>
    %154 = vector.multi_reduction <add>, %153, %cst_60 [1] : vector<16x32xf32> to vector<16xf32>
    %155 = vector.shape_cast %154 : vector<16xf32> to vector<16x1xf32>
    %cst_61 = arith.constant 3.200000e+01 : f32
    %156 = vector.broadcast %cst_61 : f32 to vector<16x1xf32>
    %157 = arith.divf %155, %156 : vector<16x1xf32>
    %cst_62 = arith.constant 9.99999974E-6 : f32
    %158 = vector.broadcast %cst_62 : f32 to vector<16x1xf32>
    %159 = arith.addf %157, %158 : vector<16x1xf32>
    %160 = math.rsqrt %159 : vector<16x1xf32>
    %161 = vector.broadcast %160 : vector<16x1xf32> to vector<16x32xf32>
    %162 = arith.mulf %152, %161 : vector<16x32xf32>
    %163 = vector.shape_cast %8 : vector<32xf32> to vector<1x32xf32>
    %164 = vector.broadcast %163 : vector<1x32xf32> to vector<16x32xf32>
    %165 = arith.mulf %162, %164 : vector<16x32xf32>
    %166 = vector.shape_cast %10 : vector<32xf32> to vector<1x32xf32>
    %167 = vector.broadcast %166 : vector<1x32xf32> to vector<16x32xf32>
    %168 = arith.addf %165, %167 : vector<16x32xf32>
    %cst_63 = arith.constant 0.000000e+00 : f32
    %169 = vector.broadcast %cst_63 : f32 to vector<16x32xf32>
    %170 = arith.maximumf %168, %169 : vector<16x32xf32>
    %171 = arith.truncf %170 : vector<16x32xf32> to vector<16x32xbf16>
    %c0_64 = arith.constant 0 : index
    %c0_65 = arith.constant 0 : index
    %172 = vector.load %arg4[%c0_64, %c0_65] : memref<32x32xbf16, #tpu.memory_space<vmem>>, vector<32x32xbf16>
    %cst_66 = arith.constant dense<0.000000e+00> : vector<16x32xf32>
    %173 = tpu.matmul %171, %172, %cst_66 {dimension_numbers = #tpu.dot_dimension_numbers<[1], [0], [0], [1], [0, 0, 1, 1], [], []>} : vector<16x32xbf16>, vector<32x32xbf16>, vector<16x32xf32> -> vector<16x32xf32>
    %174 = vector.shape_cast %12 : vector<32xf32> to vector<1x32xf32>
    %175 = vector.broadcast %174 : vector<1x32xf32> to vector<16x32xf32>
    %176 = arith.addf %173, %175 : vector<16x32xf32>
    %177 = vector.shape_cast %176 : vector<16x32xf32> to vector<1x16x32xf32>
    %c0_67 = arith.constant 0 : index
    %c0_68 = arith.constant 0 : index
    %c0_69 = arith.constant 0 : index
    %178 = vector.load %arg6[%c0_67, %c0_68, %c0_69] : memref<1x16x32xf32, #tpu.memory_space<vmem>>, vector<1x16x32xf32>
    tpu.vector_store %arg6[%c0_67, %c0_68, %c0_69], %177 {strides = array<i32>} : memref<1x16x32xf32, #tpu.memory_space<vmem>>, vector<1x16x32xf32>,
    return
  }
  func.func @transform_0(%arg0: i32) -> (i32, i32, i32) {
    %c0_i32 = arith.constant 0 : i32
    %c0_i32_0 = arith.constant 0 : i32
    %c0_i32_1 = arith.constant 0 : i32
    return %arg0, %c0_i32, %c0_i32_0 : i32, i32, i32
  }
  func.func @transform_1(%arg0: i32) -> (i32, i32) {
    %c0_i32 = arith.constant 0 : i32
    %c0_i32_0 = arith.constant 0 : i32
    %c0_i32_1 = arith.constant 0 : i32
    return %c0_i32, %c0_i32_0 : i32, i32
  }
  func.func @transform_2(%arg0: i32) -> (i32, i32) {
    %c0_i32 = arith.constant 0 : i32
    %c0_i32_0 = arith.constant 0 : i32
    %c0_i32_1 = arith.constant 0 : i32
    return %c0_i32, %c0_i32_0 : i32, i32
  }
  func.func @transform_3(%arg0: i32) -> (i32, i32) {
    %c0_i32 = arith.constant 0 : i32
    %c0_i32_0 = arith.constant 0 : i32
    %c0_i32_1 = arith.constant 0 : i32
    return %c0_i32, %c0_i32_0 : i32, i32
  }
  func.func @transform_4(%arg0: i32) -> (i32, i32) {
    %c0_i32 = arith.constant 0 : i32
    %c0_i32_0 = arith.constant 0 : i32
    %c0_i32_1 = arith.constant 0 : i32
    return %c0_i32, %c0_i32_0 : i32, i32
  }
  func.func @transform_5(%arg0: i32) -> (i32, i32, i32) {
    %c0_i32 = arith.constant 0 : i32
    %c0_i32_0 = arith.constant 0 : i32
    %c0_i32_1 = arith.constant 0 : i32
    return %arg0, %c0_i32, %c0_i32_0 : i32, i32, i32
  }
}

</mosaic_0001>

<llo_original>
// kernel: tpu_custom_call.1
$region0: #{tpu_custom_call.1}
  #allocation0 [shape = 'u32[]', space=smem, size = 0x4, offset = 0x4, fixed_abs, tag = 'smem constant byte address 0x4 - core index']
  #allocation1 [shape = 'u32[144,128]{1,0:T(1,128)}', space=vmem, size = 0x12000, scoped, tag = 'internal scratch']
  #allocation2 [shape = 'f32[1,32,32]{2,1,0:T(8,128)}', space=vmem, size = 0x4000, scoped, tag = 'scratch operand']
  %s0 = inlined_call_operand.hbm [shape: bf16[2,16,32], index: 0, kind: input, shape index: {}]
  %s1 = inlined_call_operand.hbm [shape: bf16[32,32], index: 1, kind: input, shape index: {}]
  %s2 = inlined_call_operand.hbm [shape: bf16[32,32], index: 2, kind: input, shape index: {}]
  %s3 = inlined_call_operand.hbm [shape: bf16[32,32], index: 3, kind: input, shape index: {}]
  %s4 = inlined_call_operand.hbm [shape: f32[24,32], index: 4, kind: input, shape index: {}]
  %s5 = inlined_call_operand.hbm [shape: f32[2,16,32], index: 5, kind: output, shape index: {}]
  %s6 = sld [smem:[#allocation0]]
  $region73: #{tpu_custom_call.1} parent=0
    _
  %s8 = ssub.s32 1, %s6
  %s9 = scalar_select 0, %s8, %s6
  $region1: #{tpu_custom_call.1} parent=0
    #allocation3 [shape = 'u8[8192]{0}', space=vmem, size = 0x2000, scoped, tag = 'input window, operand 0']
    #allocation4 [shape = 's32[2]{0}', space=sflag, size = 0x8, scoped, tag = 'scoped memory for tpu_custom_call.1']
    #allocation5 [shape = 's32[2]{0}', space=sflag, size = 0x8, scoped, tag = 'scoped memory for tpu_custom_call.1']
    #allocation6 [shape = 'u8[8192]{0}', space=vmem, size = 0x2000, scoped, tag = 'input window, operand 1, single buffered']
    #allocation7 [shape = 's32[1]{0}', space=sflag, size = 0x4, scoped, tag = 'scoped memory for tpu_custom_call.1']
    #allocation8 [shape = 'u8[8192]{0}', space=vmem, size = 0x2000, scoped, tag = 'input window, operand 2, single buffered']
    #allocation9 [shape = 'u8[8192]{0}', space=vmem, size = 0x2000, scoped, tag = 'input window, operand 3, single buffered']
    #allocation10 [shape = 's32[1]{0}', space=sflag, size = 0x4, scoped, tag = 'scoped memory for tpu_custom_call.1']
    #allocation11 [shape = 'u8[12288]{0}', space=vmem, size = 0x3000, scoped, tag = 'input window, operand 4, single buffered']
    #allocation12 [shape = 'u8[16384]{0}', space=vmem, size = 0x4000, scoped, tag = 'output window, operand 0']
    %10 = vsyncpa [#allocation4], 0
    %s11 = scalar_lea.sflag [#allocation4], 1
    %12 = vsyncpa %s11, 0
    %13 = vsyncpa [#allocation7], 0
    %14 = vsyncpa [#allocation10], 0
    %15 = vsyncpa [#allocation5], 0
    %s16 = scalar_lea.sflag [#allocation5], 1
    %17 = vsyncpa %s16, 0
    loop: start=0, step=1, limit=4
    $region2: #{tpu_custom_call.1} parent=1 // loop_pre_header
      _
    $region3: #{tpu_custom_call.1} parent=1 // loop_header
      %s19 = sphi 0, %s23
      %p20 = scmp.ge.s32.totalorder %s19, 4
      %s29 = sphi 0, %s31
      %s32 = sphi 0, %s29
      %s33 = sphi 0, %s32
      %s49 = sphi 0, %s33
      %s53 = sphi 0, %s53
      %s55 = sphi 0, %s53
      %s56 = sphi 0, %s55
      %s70 = sphi 0, %s56
      %s74 = sphi 0, %s74
      %s76 = sphi 0, %s74
      %s77 = sphi 0, %s76
      %s91 = sphi 0, %s77
      %s95 = sphi 0, %s95
      %s97 = sphi 0, %s95
      %s98 = sphi 0, %s97
      %s112 = sphi 0, %s98
      %s116 = sphi 0, %s116
      %s118 = sphi 0, %s116
      %s119 = sphi 0, %s118
      %s133 = sphi 0, %s119
      %s139 = sphi 0, %s141
      %s142 = sphi 0, %s139
      %s143 = sphi 0, %s142
      %s159 = sphi 0, %s143
    $region4: #{tpu_custom_call.1} parent=1 // loop_header_branch
      %22 = sbr.rel (%p20) target = $region8
    $region5: #{tpu_custom_call.1} parent=1 // loop_body
      %s24 = ssub.s32 %s19, 1
      %s25 = ssub.s32 %s19, 2
      %s26 = sadd.s32 %s19, 1
      %s27 = ssub.s32 %s19, %s26
      %p28 = scmp.eq.s32.totalorder %s27, 0
      %s30 = sadd.s32 %s29, 1
      %s31 = scalar_select %p28, %s29, %s30
      %p34 = pneg %p28
      %p35 = scmp.eq.s32.totalorder %s19, 1
      %p36 = por %p34, %p35
      %p37 = scmp.ne.s32.totalorder %s29, %s32
      %p38 = scmp.eq.s32.totalorder %s19, 0
      %p39 = por %p37, %p38
      %p40 = scmp.ne.s32.totalorder %s29, %s32
      %p41 = scmp.eq.s32.totalorder %s24, 1
      %p42 = por %p40, %p41
      %p43 = scmp.ne.s32.totalorder %s32, %s33
      %p44 = scmp.eq.s32.totalorder %s24, 0
      %p45 = por %p43, %p44
      %p46 = scmp.ne.s32.totalorder %s32, %s33
      %p47 = scmp.eq.s32.totalorder %s25, 1
      %p48 = por %p46, %p47
      %p50 = scmp.ne.s32.totalorder %s33, %s49
      %p51 = scmp.eq.s32.totalorder %s25, 0
      %p52 = por %p50, %p51
      %s54 = sadd.s32 %s53, 1
      %p57 = scmp.eq.s32.totalorder %s19, 1
      %p58 = scmp.ne.s32.totalorder %s53, %s55
      %p59 = scmp.eq.s32.totalorder %s19, 0
      %p60 = por %p58, %p59
      %p61 = scmp.ne.s32.totalorder %s53, %s55
      %p62 = scmp.eq.s32.totalorder %s24, 1
      %p63 = por %p61, %p62
      %p64 = scmp.ne.s32.totalorder %s55, %s56
      %p65 = scmp.eq.s32.totalorder %s24, 0
      %p66 = por %p64, %p65
      %p67 = scmp.ne.s32.totalorder %s55, %s56
      %p68 = scmp.eq.s32.totalorder %s25, 1
      %p69 = por %p67, %p68
      %p71 = scmp.ne.s32.totalorder %s56, %s70
      %p72 = scmp.eq.s32.totalorder %s25, 0
      %p73 = por %p71, %p72
      %s75 = sadd.s32 %s74, 1
      %p78 = scmp.eq.s32.totalorder %s19, 1
      %p79 = scmp.ne.s32.totalorder %s74, %s76
      %p80 = scmp.eq.s32.totalorder %s19, 0
      %p81 = por %p79, %p80
      %p82 = scmp.ne.s32.totalorder %s74, %s76
      %p83 = scmp.eq.s32.totalorder %s24, 1
      %p84 = por %p82, %p83
      %p85 = scmp.ne.s32.totalorder %s76, %s77
      %p86 = scmp.eq.s32.totalorder %s24, 0
      %p87 = por %p85, %p86
      %p88 = scmp.ne.s32.totalorder %s76, %s77
      %p89 = scmp.eq.s32.totalorder %s25, 1
      %p90 = por %p88, %p89
      %p92 = scmp.ne.s32.totalorder %s77, %s91
      %p93 = scmp.eq.s32.totalorder %s25, 0
      %p94 = por %p92, %p93
      %s96 = sadd.s32 %s95, 1
      %p99 = scmp.eq.s32.totalorder %s19, 1
      %p100 = scmp.ne.s32.totalorder %s95, %s97
      %p101 = scmp.eq.s32.totalorder %s19, 0
      %p102 = por %p100, %p101
      %p103 = scmp.ne.s32.totalorder %s95, %s97
      %p104 = scmp.eq.s32.totalorder %s24, 1
      %p105 = por %p103, %p104
      %p106 = scmp.ne.s32.totalorder %s97, %s98
      %p107 = scmp.eq.s32.totalorder %s24, 0
      %p108 = por %p106, %p107
      %p109 = scmp.ne.s32.totalorder %s97, %s98
      %p110 = scmp.eq.s32.totalorder %s25, 1
      %p111 = por %p109, %p110
      %p113 = scmp.ne.s32.totalorder %s98, %s112
      %p114 = scmp.eq.s32.totalorder %s25, 0
      %p115 = por %p113, %p114
      %s117 = sadd.s32 %s116, 1
      %p120 = scmp.eq.s32.totalorder %s19, 1
      %p121 = scmp.ne.s32.totalorder %s116, %s118
      %p122 = scmp.eq.s32.totalorder %s19, 0
      %p123 = por %p121, %p122
      %p124 = scmp.ne.s32.totalorder %s116, %s118
      %p125 = scmp.eq.s32.totalorder %s24, 1
      %p126 = por %p124, %p125
      %p127 = scmp.ne.s32.totalorder %s118, %s119
      %p128 = scmp.eq.s32.totalorder %s24, 0
      %p129 = por %p127, %p128
      %p130 = scmp.ne.s32.totalorder %s118, %s119
      %p131 = scmp.eq.s32.totalorder %s25, 1
      %p132 = por %p130, %p131
      %p134 = scmp.ne.s32.totalorder %s119, %s133
      %p135 = scmp.eq.s32.totalorder %s25, 0
      %p136 = por %p134, %p135
      %s137 = ssub.s32 %s19, %s26
      %p138 = scmp.eq.s32.totalorder %s137, 0
      %s140 = sadd.s32 %s139, 1
      %s141 = scalar_select %p138, %s139, %s140
      %p144 = pneg %p138
      %p145 = scmp.eq.s32.totalorder %s19, 1
      %p146 = por %p144, %p145
      %p147 = scmp.ne.s32.totalorder %s139, %s142
      %p148 = scmp.eq.s32.totalorder %s19, 0
      %p149 = por %p147, %p148
      %p150 = scmp.ne.s32.totalorder %s139, %s142
      %p151 = scmp.eq.s32.totalorder %s24, 1
      %p152 = por %p150, %p151
      %p153 = scmp.ne.s32.totalorder %s142, %s143
      %p154 = scmp.eq.s32.totalorder %s24, 0
      %p155 = por %p153, %p154
      %p156 = scmp.ne.s32.totalorder %s142, %s143
      %p157 = scmp.eq.s32.totalorder %s25, 1
      %p158 = por %p156, %p157
      %p160 = scmp.ne.s32.totalorder %s143, %s159
      %p161 = scmp.eq.s32.totalorder %s25, 0
      %p162 = por %p160, %p161
      %p163 = scmp.le.s32.totalorder 1, %s19
      %p164 = scmp.lt.s32.totalorder %s19, 3
      %p165 = pnand %p163, %p164
      %p166 = pneg %p165
      // Predicated region
      $region9: #{tpu_custom_call.1} parent=5 // pred_check
        _
      $region10: #{tpu_custom_call.1} parent=5 // pred_check_branch
        %168 = sbr.rel (%p165) target = $region12
      $region11: #{tpu_custom_call.1} parent=5 // pred_region
        %s169 = ssub.s32 %s19, 1
        // Predicated region
        $region13: #{tpu_custom_call.1} parent=11 // pred_check
          %p170 = pneg %p66
        $region14: #{tpu_custom_call.1} parent=11 // pred_check_branch
          %172 = sbr.rel (%p170) target = $region16
        $region15: #{tpu_custom_call.1} parent=11 // pred_region
          %s174 = ssub.s32 256, 256
          %175 = vsyncadd [#allocation7], %s174
          %s176 = sshll.u32 [#allocation6], 4
          %s177 = int_to_ptr.vmem [resolvable:$true] %s176
          %182 = dma.hbm_to_vmem [thread:$0]  %s1, 256, %s177, [#allocation7], 64, 64, 4
        $region16: #{tpu_custom_call.1} parent=11 // pred_fallthru
          _
        // Predicated region
        $region17: #{tpu_custom_call.1} parent=11 // pred_check
          %p183 = pneg %p87
        $region18: #{tpu_custom_call.1} parent=11 // pred_check_branch
          %185 = sbr.rel (%p183) target = $region20
        $region19: #{tpu_custom_call.1} parent=11 // pred_region
          %s187 = ssub.s32 256, 256
          %188 = vsyncadd [#allocation7], %s187
          %s189 = sshll.u32 [#allocation8], 4
          %s190 = int_to_ptr.vmem [resolvable:$true] %s189
          %195 = dma.hbm_to_vmem [thread:$0]  %s2, 256, %s190, [#allocation7], 64, 64, 4
        $region20: #{tpu_custom_call.1} parent=11 // pred_fallthru
          _
        // Predicated region
        $region21: #{tpu_custom_call.1} parent=11 // pred_check
          %p196 = pneg %p108
        $region22: #{tpu_custom_call.1} parent=11 // pred_check_branch
          %198 = sbr.rel (%p196) target = $region24
        $region23: #{tpu_custom_call.1} parent=11 // pred_region
          %s200 = ssub.s32 256, 256
          %201 = vsyncadd [#allocation10], %s200
          %s202 = sshll.u32 [#allocation9], 4
          %s203 = int_to_ptr.vmem [resolvable:$true] %s202
          %208 = dma.hbm_to_vmem [thread:$0]  %s3, 256, %s203, [#allocation10], 64, 64, 4
        $region24: #{tpu_custom_call.1} parent=11 // pred_fallthru
          _
        // Predicated region
        $region25: #{tpu_custom_call.1} parent=11 // pred_check
          %p209 = pneg %p129
        $region26: #{tpu_custom_call.1} parent=11 // pred_check_branch
          %211 = sbr.rel (%p209) target = $region28
        $region27: #{tpu_custom_call.1} parent=11 // pred_region
          %s213 = ssub.s32 384, 384
          %214 = vsyncadd [#allocation10], %s213
          %s215 = sshll.u32 [#allocation11], 4
          %s216 = int_to_ptr.vmem [resolvable:$true] %s215
          %221 = dma.hbm_to_vmem [thread:$0]  %s4, 384, %s216, [#allocation10], 128, 128, 8
        $region28: #{tpu_custom_call.1} parent=11 // pred_fallthru
          _
      $region12: #{tpu_custom_call.1} parent=5 // pred_fallthru
        _
      %p222 = scmp.lt.s32.totalorder %s19, 2
      // Predicated region
      $region29: #{tpu_custom_call.1} parent=5 // pred_check
        %p223 = pneg %p222
      $region30: #{tpu_custom_call.1} parent=5 // pred_check_branch
        %225 = sbr.rel (%p223) target = $region32
      $region31: #{tpu_custom_call.1} parent=5 // pred_region
        // Predicated region
        $region33: #{tpu_custom_call.1} parent=31 // pred_check
          %p226 = pneg %p39
        $region34: #{tpu_custom_call.1} parent=31 // pred_check_branch
          %228 = sbr.rel (%p226) target = $region36
        $region35: #{tpu_custom_call.1} parent=31 // pred_region
          %s229 = sand.u32 %s29, 1
          %s230 = scalar_lea.sflag [#allocation4], %s229
          %s231 = sand.u32 %s29, 1
          %s232 = smul.addr %s231, 8
          %s233 = scalar_lea.vmem [#allocation3], %s232
          %s235 = ssub.s32 128, 128
          %236 = vsyncadd %s230, %s235
          %s237 = smul.addr %s19, 2
          %s238 = smul.addr %s237, 64
          %s239 = scalar_lea.hbm %s0, %s238
          %s240 = sshll.u32 %s233, 4
          %s241 = int_to_ptr.vmem [resolvable:$true] %s240
          %246 = dma.hbm_to_vmem [thread:$0]  %s239, 128, %s241, %s230, 64, 64, 4
        $region36: #{tpu_custom_call.1} parent=31 // pred_fallthru
          _
      $region32: #{tpu_custom_call.1} parent=5 // pred_fallthru
        _
      %p247 = scmp.le.s32.totalorder 1, %s19
      %p248 = scmp.lt.s32.totalorder %s19, 3
      %p249 = pnand %p247, %p248
      %p250 = pneg %p249
      // Predicated region
      $region37: #{tpu_custom_call.1} parent=5 // pred_check
        _
      $region38: #{tpu_custom_call.1} parent=5 // pred_check_branch
        %252 = sbr.rel (%p249) target = $region40
      $region39: #{tpu_custom_call.1} parent=5 // pred_region
        %s253 = ssub.s32 %s19, 1
        %s254 = sand.u32 %s32, 1
        %s255 = scalar_lea.sflag [#allocation4], %s254
        %s256 = sand.u32 %s32, 1
        %s257 = smul.addr %s256, 8
        %s258 = scalar_lea.vmem [#allocation3], %s257
        // Predicated region
        $region41: #{tpu_custom_call.1} parent=39 // pred_check
          %p259 = pneg %p45
        $region42: #{tpu_custom_call.1} parent=39 // pred_check_branch
          %261 = sbr.rel (%p259) target = $region44
        $region43: #{tpu_custom_call.1} parent=39 // pred_region
          %262 = dma.done %s255, 128
        $region44: #{tpu_custom_call.1} parent=39 // pred_fallthru
          _
        // Predicated region
        $region45: #{tpu_custom_call.1} parent=39 // pred_check
          %p263 = pneg %p66
        $region46: #{tpu_custom_call.1} parent=39 // pred_check_branch
          %265 = sbr.rel (%p263) target = $region48
        $region47: #{tpu_custom_call.1} parent=39 // pred_region
          %266 = dma.done [#allocation7], 256
        $region48: #{tpu_custom_call.1} parent=39 // pred_fallthru
          _
        // Predicated region
        $region49: #{tpu_custom_call.1} parent=39 // pred_check
          %p267 = pneg %p87
        $region50: #{tpu_custom_call.1} parent=39 // pred_check_branch
          %269 = sbr.rel (%p267) target = $region52
        $region51: #{tpu_custom_call.1} parent=39 // pred_region
          %270 = dma.done [#allocation7], 256
        $region52: #{tpu_custom_call.1} parent=39 // pred_fallthru
          _
        // Predicated region
        $region53: #{tpu_custom_call.1} parent=39 // pred_check
          %p271 = pneg %p108
        $region54: #{tpu_custom_call.1} parent=39 // pred_check_branch
          %273 = sbr.rel (%p271) target = $region56
        $region55: #{tpu_custom_call.1} parent=39 // pred_region
          %274 = dma.done [#allocation10], 256
        $region56: #{tpu_custom_call.1} parent=39 // pred_fallthru
          _
        // Predicated region
        $region57: #{tpu_custom_call.1} parent=39 // pred_check
          %p275 = pneg %p129
        $region58: #{tpu_custom_call.1} parent=39 // pred_check_branch
          %277 = sbr.rel (%p275) target = $region60
        $region59: #{tpu_custom_call.1} parent=39 // pred_region
          %278 = dma.done [#allocation10], 384
        $region60: #{tpu_custom_call.1} parent=39 // pred_fallthru
          _
        %s279 = sand.u32 %s32, 1
        %s280 = scalar_lea.sflag [#allocation4], %s279
        %s281 = sand.u32 %s32, 1
        %s282 = smul.addr %s281, 8
        %s283 = scalar_lea.vmem [#allocation3], %s282
        %p284 = pneg %p45
        %p285 = pneg %p42
        %p286 = pneg %p66
        %p287 = pneg %p63
        %p288 = pneg %p87
        %p289 = pneg %p84
        %p290 = pneg %p108
        %p291 = pneg %p105
        %p292 = pneg %p129
        %p293 = pneg %p126
        %p294 = pneg %p155
        %p295 = pneg %p152
        %s296 = sand.u32 %s142, 1
        %s297 = scalar_lea.sflag [#allocation5], %s296
        %s298 = sand.u32 %s142, 1
        %s299 = smul.addr %s298, 16
        %s300 = scalar_lea.vmem [#allocation12], %s299
        %v302 = vld [vmem:[#allocation11] sm:$0xff]
        %v303 = vld [vmem:[#allocation11 + $0x8] sm:$0x7f]
        %v304 = vld [vmem:[#allocation11 + $0xf] sm:$0x1]
        %v305 = vld [vmem:[#allocation11 + $0x10] sm:$0x1]
        %v306 = vld [vmem:[#allocation11 + $0x11] sm:$0x1]
        %v307 = vld [vmem:[#allocation11 + $0x12] sm:$0x1]
        %v308 = vld [vmem:[#allocation11 + $0x13] sm:$0x1]
        %v309 = vld [vmem:[#allocation11 + $0x14] sm:$0x1]
        %v310 = vld [vmem:[%s258] sm:$0xf]
        %v311 = vld [vmem:[%s258 + $0x4] sm:$0xf]
        %v312 = vld [vmem:[#allocation6] sm:$0xf]
        %v313 = vld [vmem:[#allocation6 + $0x4] sm:$0xf]
        %v314 = vld [vmem:[#allocation6 + $0x8] sm:$0xf]
        %v315 = vld [vmem:[#allocation6 + $0xc] sm:$0xf]
        %v316 = vlaneseq
        %v317 = vshrl.u32 %v316, 7
        %v318 = vsub.s32 0, %v317
        %v319 = vrot.slane %v305, %v318
        %v322 = vunpack.c.l.b16 %v310
        %v323 = vunpack.c.l.b16 %v311
        %v324 = vpack.c.b16 %v323, %v322
        %v329 = vunpack.c.l.b16 %v312
        %v330 = vunpack.c.l.b16 %v313
        %v331 = vunpack.c.l.b16 %v314
        %v332 = vunpack.c.l.b16 %v315
        %v333 = vpack.c.b16 %v330, %v329
        %v334 = vpack.c.b16 %v332, %v331
        %vm337 = vcmask 261120
        %v339 = vsel %vm337, %v324, 0
        %341 = vmatprep.subr.bf16.mxu0 0
        %342 = vmatpush1.bf16.msra.mxu0 %v333
        %343 = vmatprep.subr.bf16.mxu0 0
        %344 = vmatpush1.bf16.msra.mxu0 %v334
        %345 = vmatprep.subr.bf16.mxu0 0
        %346 = vmatpush1.bf16.msra.mxu0 0
        %347 = vmatprep.subr.bf16.mxu0 0
        %348 = vmatpush1.bf16.msra.mxu0 0
        %349 = vmatprep.subr.bf16.mxu0 0
        %350 = vmatpush1.bf16.msra.mxu0 0
        %351 = vmatprep.subr.bf16.mxu0 0
        %352 = vmatpush1.bf16.msra.mxu0 0
        %353 = vmatprep.subr.bf16.mxu0 0
        %354 = vmatpush1.bf16.msra.mxu0 0
        %355 = vmatprep.subr.bf16.mxu0 0
        %356 = vmatpush1.bf16.msra.mxu0 0
        %357 = vmatprep.subr.bf16.mxu0 0
        %358 = vmatpush1.bf16.msra.mxu0 0
        %359 = vmatprep.subr.bf16.mxu0 0
        %360 = vmatpush1.bf16.msra.mxu0 0
        %361 = vmatprep.subr.bf16.mxu0 0
        %362 = vmatpush1.bf16.msra.mxu0 0
        %363 = vmatprep.subr.bf16.mxu0 0
        %364 = vmatpush1.bf16.msra.mxu0 0
        %365 = vmatprep.subr.bf16.mxu0 0
        %366 = vmatpush1.bf16.msra.mxu0 0
        %367 = vmatprep.subr.bf16.mxu0 0
        %368 = vmatpush1.bf16.msra.mxu0 0
        %369 = vmatprep.subr.bf16.mxu0 0
        %370 = vmatpush1.bf16.msra.mxu0 0
        %371 = vmatprep.subr.bf16.mxu0 0
        %372 = vmatpush1.bf16.msra.mxu0 0
        %373 = vmatprep.mubr.bf16.mxu0 0
        %374 = vmatmul.mubr.bf16.gmra.mrb[0].mxu0 %v339
        %v375 = vpop.f32.mrb[0].mxu0
        %v376 = vadd.f32 %v319, %v375
        %v377 = vpop.f32.mrb[0].mxu0
        %v378 = vpop.f32.mrb[0].mxu0
        %v379 = vadd.f32 %v319, %v378
        %v380 = vpop.f32.mrb[0].mxu0
        %381 = vdwg.mxu0
        %v382 = vld [vmem:[#allocation8] sm:$0xf]
        %v383 = vld [vmem:[#allocation8 + $0x4] sm:$0xf]
        %v384 = vld [vmem:[#allocation8 + $0x8] sm:$0xf]
        %v385 = vld [vmem:[#allocation8 + $0xc] sm:$0xf]
        %v386 = vlaneseq
        %v387 = vshrl.u32 %v386, 7
        %v388 = vsub.s32 0, %v387
        %v389 = vrot.slane %v306, %v388
        %v394 = vunpack.c.l.b16 %v382
        %v395 = vunpack.c.l.b16 %v383
        %v396 = vunpack.c.l.b16 %v384
        %v397 = vunpack.c.l.b16 %v385
        %v398 = vpack.c.b16 %v395, %v394
        %v399 = vpack.c.b16 %v397, %v396
        %402 = vmatprep.subr.bf16.mxu0 0
        %403 = vmatpush1.bf16.msra.mxu0 %v398
        %404 = vmatprep.subr.bf16.mxu0 0
        %405 = vmatpush1.bf16.msra.mxu0 %v399
        %406 = vmatprep.subr.bf16.mxu0 0
        %407 = vmatpush1.bf16.msra.mxu0 0
        %408 = vmatprep.subr.bf16.mxu0 0
        %409 = vmatpush1.bf16.msra.mxu0 0
        %410 = vmatprep.subr.bf16.mxu0 0
        %411 = vmatpush1.bf16.msra.mxu0 0
        %412 = vmatprep.subr.bf16.mxu0 0
        %413 = vmatpush1.bf16.msra.mxu0 0
        %414 = vmatprep.subr.bf16.mxu0 0
        %415 = vmatpush1.bf16.msra.mxu0 0
        %416 = vmatprep.subr.bf16.mxu0 0
        %417 = vmatpush1.bf16.msra.mxu0 0
        %418 = vmatprep.subr.bf16.mxu0 0
        %419 = vmatpush1.bf16.msra.mxu0 0
        %420 = vmatprep.subr.bf16.mxu0 0
        %421 = vmatpush1.bf16.msra.mxu0 0
        %422 = vmatprep.subr.bf16.mxu0 0
        %423 = vmatpush1.bf16.msra.mxu0 0
        %424 = vmatprep.subr.bf16.mxu0 0
        %425 = vmatpush1.bf16.msra.mxu0 0
        %426 = vmatprep.subr.bf16.mxu0 0
        %427 = vmatpush1.bf16.msra.mxu0 0
        %428 = vmatprep.subr.bf16.mxu0 0
        %429 = vmatpush1.bf16.msra.mxu0 0
        %430 = vmatprep.subr.bf16.mxu0 0
        %431 = vmatpush1.bf16.msra.mxu0 0
        %432 = vmatprep.subr.bf16.mxu0 0
        %433 = vmatpush1.bf16.msra.mxu0 0
        %434 = vmatprep.mubr.bf16.mxu0 0
        %435 = vmatmul.mubr.bf16.gmra.mrb[0].mxu0 %v339
        %v436 = vpop.f32.mrb[0].mxu0
        %v437 = vadd.f32 %v389, %v436
        %v438 = vpop.f32.mrb[0].mxu0
        %v439 = vpop.f32.mrb[0].mxu0
        %v440 = vadd.f32 %v389, %v439
        %v441 = vpop.f32.mrb[0].mxu0
        %442 = vdwg.mxu0
        %v443 = vxor.u32 %v437, 2147483648
        %v444 = vxor.u32 %v440, 2147483648
        %v445 = vmul.f32 %v443, 1.442695
        %v446 = vpow.pop %v445
        %v447 = vmul.f32 %v444, 1.442695
        %v448 = vpow.pop %v447
        %v449 = vadd.f32 %v446, 1.0
        %v450 = vadd.f32 %v448, 1.0
        %v451 = vrcp.pop %v449
        %v452 = vmul.f32 1.0, %v451
        %v453 = vrcp.pop %v450
        %v454 = vmul.f32 1.0, %v453
        %v455 = vmul.f32 %v376, %v452
        %v456 = vmul.f32 %v379, %v454
        %457 = vst.msk [vmem:[#allocation2] sm:$0xff] %vm337, 0.0
        %458 = vst.msk [vmem:[#allocation2 + $0x18] sm:$0xff] %vm337, 0.0
        %459 = vst.msk [vmem:[#allocation2 + $0x8] sm:$0xff] %vm337, %v455
        %460 = vst.msk [vmem:[#allocation2 + $0x10] sm:$0xff] %vm337, %v456
        %v461 = vld [vmem:[#allocation2 + $0x1] sm:$0xff]
        %v462 = vld [vmem:[#allocation2 + $0x9] sm:$0xff]
        %v463 = vlaneseq
        %v464 = vshrl.u32 %v463, 7
        %v465 = vsub.s32 0, %v464
        %v466 = vrot.slane %v302, %v465
        %v467 = vmul.f32 %v461, %v466
        %v468 = vmul.f32 %v462, %v466
        %v469 = vadd.f32 %v467, 0.0
        %v470 = vadd.f32 %v468, 0.0
        %v471 = vld [vmem:[#allocation2 + $0x2] sm:$0xff]
        %v472 = vld [vmem:[#allocation2 + $0xa] sm:$0xff]
        %v473 = vlaneseq
        %v474 = vshrl.u32 %v473, 7
        %v475 = vsub.s32 1, %v474
        %v476 = vrot.slane %v302, %v475
        %v477 = vmul.f32 %v471, %v476
        %v478 = vmul.f32 %v472, %v476
        %v479 = vadd.f32 %v469, %v477
        %v480 = vadd.f32 %v470, %v478
        %v481 = vld [vmem:[#allocation2 + $0x3] sm:$0xff]
        %v482 = vld [vmem:[#allocation2 + $0xb] sm:$0xff]
        %v483 = vlaneseq
        %v484 = vshrl.u32 %v483, 7
        %v485 = vsub.s32 2, %v484
        %v486 = vrot.slane %v302, %v485
        %v487 = vmul.f32 %v481, %v486
        %v488 = vmul.f32 %v482, %v486
        %v489 = vadd.f32 %v479, %v487
        %v490 = vadd.f32 %v480, %v488
        %v491 = vld [vmem:[#allocation2 + $0x4] sm:$0xff]
        %v492 = vld [vmem:[#allocation2 + $0xc] sm:$0xff]
        %v493 = vlaneseq
        %v494 = vshrl.u32 %v493, 7
        %v495 = vsub.s32 3, %v494
        %v496 = vrot.slane %v302, %v495
        %v497 = vmul.f32 %v491, %v496
        %v498 = vmul.f32 %v492, %v496
        %v499 = vadd.f32 %v489, %v497
        %v500 = vadd.f32 %v490, %v498
        %v501 = vld [vmem:[#allocation2 + $0x5] sm:$0xff]
        %v502 = vld [vmem:[#allocation2 + $0xd] sm:$0xff]
        %v503 = vlaneseq
        %v504 = vshrl.u32 %v503, 7
        %v505 = vsub.s32 4, %v504
        %v506 = vrot.slane %v302, %v505
        %v507 = vmul.f32 %v501, %v506
        %v508 = vmul.f32 %v502, %v506
        %v509 = vadd.f32 %v499, %v507
        %v510 = vadd.f32 %v500, %v508
        %v511 = vld [vmem:[#allocation2 + $0x6] sm:$0xff]
        %v512 = vld [vmem:[#allocation2 + $0xe] sm:$0xff]
        %v513 = vlaneseq
        %v514 = vshrl.u32 %v513, 7
        %v515 = vsub.s32 5, %v514
        %v516 = vrot.slane %v302, %v515
        %v517 = vmul.f32 %v511, %v516
        %v518 = vmul.f32 %v512, %v516
        %v519 = vadd.f32 %v509, %v517
        %v520 = vadd.f32 %v510, %v518
        %v521 = vld [vmem:[#allocation2 + $0x7] sm:$0xff]
        %v522 = vld [vmem:[#allocation2 + $0xf] sm:$0xff]
        %v523 = vlaneseq
        %v524 = vshrl.u32 %v523, 7
        %v525 = vsub.s32 6, %v524
        %v526 = vrot.slane %v302, %v525
        %v527 = vmul.f32 %v521, %v526
        %v528 = vmul.f32 %v522, %v526
        %v529 = vadd.f32 %v519, %v527
        %v530 = vadd.f32 %v520, %v528
        %v531 = vld [vmem:[#allocation2 + $0x8] sm:$0xff]
        %v532 = vld [vmem:[#allocation2 + $0x10] sm:$0xff]
        %v533 = vlaneseq
        %v534 = vshrl.u32 %v533, 7
        %v535 = vsub.s32 7, %v534
        %v536 = vrot.slane %v302, %v535
        %v537 = vmul.f32 %v531, %v536
        %v538 = vmul.f32 %v532, %v536
        %v539 = vadd.f32 %v529, %v537
        %v540 = vadd.f32 %v530, %v538
        %v541 = vld [vmem:[#allocation2 + $0x11] sm:$0xff]
        %v542 = vlaneseq
        %v543 = vshrl.u32 %v542, 7
        %v544 = vsub.s32 0, %v543
        %v545 = vrot.slane %v303, %v544
        %v546 = vmul.f32 %v462, %v545
        %v547 = vmul.f32 %v541, %v545
        %v548 = vadd.f32 %v539, %v546
        %v549 = vadd.f32 %v540, %v547
        %v550 = vld [vmem:[#allocation2 + $0x12] sm:$0xff]
        %v551 = vlaneseq
        %v552 = vshrl.u32 %v551, 7
        %v553 = vsub.s32 1, %v552
        %v554 = vrot.slane %v303, %v553
        %v555 = vmul.f32 %v472, %v554
        %v556 = vmul.f32 %v550, %v554
        %v557 = vadd.f32 %v548, %v555
        %v558 = vadd.f32 %v549, %v556
        %v559 = vld [vmem:[#allocation2 + $0x13] sm:$0xff]
        %v560 = vlaneseq
        %v561 = vshrl.u32 %v560, 7
        %v562 = vsub.s32 2, %v561
        %v563 = vrot.slane %v303, %v562
        %v564 = vmul.f32 %v482, %v563
        %v565 = vmul.f32 %v559, %v563
        %v566 = vadd.f32 %v557, %v564
        %v567 = vadd.f32 %v558, %v565
        %v568 = vld [vmem:[#allocation2 + $0x14] sm:$0xff]
        %v569 = vlaneseq
        %v570 = vshrl.u32 %v569, 7
        %v571 = vsub.s32 3, %v570
        %v572 = vrot.slane %v303, %v571
        %v573 = vmul.f32 %v492, %v572
        %v574 = vmul.f32 %v568, %v572
        %v575 = vadd.f32 %v566, %v573
        %v576 = vadd.f32 %v567, %v574
        %v577 = vld [vmem:[#allocation2 + $0x15] sm:$0xff]
        %v578 = vlaneseq
        %v579 = vshrl.u32 %v578, 7
        %v580 = vsub.s32 4, %v579
        %v581 = vrot.slane %v303, %v580
        %v582 = vmul.f32 %v502, %v581
        %v583 = vmul.f32 %v577, %v581
        %v584 = vadd.f32 %v575, %v582
        %v585 = vadd.f32 %v576, %v583
        %v586 = vld [vmem:[#allocation2 + $0x16] sm:$0xff]
        %v587 = vlaneseq
        %v588 = vshrl.u32 %v587, 7
        %v589 = vsub.s32 5, %v588
        %v590 = vrot.slane %v303, %v589
        %v591 = vmul.f32 %v512, %v590
        %v592 = vmul.f32 %v586, %v590
        %v593 = vadd.f32 %v584, %v591
        %v594 = vadd.f32 %v585, %v592
        %v595 = vld [vmem:[#allocation2 + $0x17] sm:$0xff]
        %v596 = vlaneseq
        %v597 = vshrl.u32 %v596, 7
        %v598 = vsub.s32 6, %v597
        %v599 = vrot.slane %v303, %v598
        %v600 = vmul.f32 %v522, %v599
        %v601 = vmul.f32 %v595, %v599
        %v602 = vadd.f32 %v593, %v600
        %v603 = vadd.f32 %v594, %v601
        %v604 = vlaneseq
        %v605 = vshrl.u32 %v604, 7
        %v606 = vsub.s32 0, %v605
        %v607 = vrot.slane %v304, %v606
        %v608 = vadd.f32 %v602, %v607
        %v609 = vadd.f32 %v603, %v607
        %v610 = vsel %vm337, %v608, 0.0
        %611 = vadd.xlane.f32.xlu0 %v610
        %v612 = vpop.xlane.xlu0 %611
        %v613 = vsel %vm337, %v609, 0.0
        %614 = vadd.xlane.f32.xlu0 %v613
        %v615 = vpop.xlane.xlu0 %614
        %v616 = vrcp.pop 32.0
        %v617 = vmul.f32 %v612, %v616
        %v618 = vmul.f32 %v615, %v616
        %v619 = vsub.f32 %v608, %v617
        %v620 = vsub.f32 %v609, %v618
        %v621 = vmul.f32 %v619, %v619
        %v622 = vmul.f32 %v620, %v620
        %v623 = vsel %vm337, %v621, 0.0
        %624 = vadd.xlane.f32.xlu0 %v623
        %v625 = vpop.xlane.xlu0 %624
        %v626 = vsel %vm337, %v622, 0.0
        %627 = vadd.xlane.f32.xlu0 %v626
        %v628 = vpop.xlane.xlu0 %627
        %v629 = vmul.f32 %v625, %v616
        %v630 = vmul.f32 %v628, %v616
        %v631 = vadd.f32 %v629, 1e-05
        %v632 = vadd.f32 %v630, 1e-05
        %v633 = vrsqrt.pop %v631
        %v634 = vrsqrt.pop %v632
        %v635 = vmul.f32 %v619, %v633
        %v636 = vmul.f32 %v620, %v634
        %v637 = vlaneseq
        %v638 = vshrl.u32 %v637, 7
        %v639 = vsub.s32 0, %v638
        %v640 = vrot.slane %v307, %v639
        %v641 = vmul.f32 %v635, %v640
        %v642 = vmul.f32 %v636, %v640
        %v643 = vlaneseq
        %v644 = vshrl.u32 %v643, 7
        %v645 = vsub.s32 0, %v644
        %v646 = vrot.slane %v308, %v645
        %v647 = vadd.f32 %v641, %v646
        %v648 = vadd.f32 %v642, %v646
        %v649 = vmax.f32 %v647, 0.0
        %v650 = vmax.f32 %v648, 0.0
        %v651 = vpack.c.bf16 %v650, %v649
        %v652 = vld [vmem:[#allocation9] sm:$0xf]
        %v653 = vld [vmem:[#allocation9 + $0x4] sm:$0xf]
        %v654 = vld [vmem:[#allocation9 + $0x8] sm:$0xf]
        %v655 = vld [vmem:[#allocation9 + $0xc] sm:$0xf]
        %v656 = vlaneseq
        %v657 = vshrl.u32 %v656, 7
        %v658 = vsub.s32 0, %v657
        %v659 = vrot.slane %v309, %v658
        %v664 = vunpack.c.l.b16 %v652
        %v665 = vunpack.c.l.b16 %v653
        %v666 = vunpack.c.l.b16 %v654
        %v667 = vunpack.c.l.b16 %v655
        %v668 = vpack.c.b16 %v665, %v664
        %v669 = vpack.c.b16 %v667, %v666
        %v673 = vsel %vm337, %v651, 0
        %675 = vmatprep.subr.bf16.mxu0 0
        %676 = vmatpush1.bf16.msra.mxu0 %v668
        %677 = vmatprep.subr.bf16.mxu0 0
        %678 = vmatpush1.bf16.msra.mxu0 %v669
        %679 = vmatprep.subr.bf16.mxu0 0
        %680 = vmatpush1.bf16.msra.mxu0 0
        %681 = vmatprep.subr.bf16.mxu0 0
        %682 = vmatpush1.bf16.msra.mxu0 0
        %683 = vmatprep.subr.bf16.mxu0 0
        %684 = vmatpush1.bf16.msra.mxu0 0
        %685 = vmatprep.subr.bf16.mxu0 0
        %686 = vmatpush1.bf16.msra.mxu0 0
        %687 = vmatprep.subr.bf16.mxu0 0
        %688 = vmatpush1.bf16.msra.mxu0 0
        %689 = vmatprep.subr.bf16.mxu0 0
        %690 = vmatpush1.bf16.msra.mxu0 0
        %691 = vmatprep.subr.bf16.mxu0 0
        %692 = vmatpush1.bf16.msra.mxu0 0
        %693 = vmatprep.subr.bf16.mxu0 0
        %694 = vmatpush1.bf16.msra.mxu0 0
        %695 = vmatprep.subr.bf16.mxu0 0
        %696 = vmatpush1.bf16.msra.mxu0 0
        %697 = vmatprep.subr.bf16.mxu0 0
        %698 = vmatpush1.bf16.msra.mxu0 0
        %699 = vmatprep.subr.bf16.mxu0 0
        %700 = vmatpush1.bf16.msra.mxu0 0
        %701 = vmatprep.subr.bf16.mxu0 0
        %702 = vmatpush1.bf16.msra.mxu0 0
        %703 = vmatprep.subr.bf16.mxu0 0
        %704 = vmatpush1.bf16.msra.mxu0 0
        %705 = vmatprep.subr.bf16.mxu0 0
        %706 = vmatpush1.bf16.msra.mxu0 0
        %707 = vmatprep.mubr.bf16.mxu0 0
        %708 = vmatmul.mubr.bf16.gmra.mrb[0].mxu0 %v673
        %v709 = vpop.f32.mrb[0].mxu0
        %v710 = vadd.f32 %v659, %v709
        %v711 = vpop.f32.mrb[0].mxu0
        %v712 = vpop.f32.mrb[0].mxu0
        %v713 = vadd.f32 %v659, %v712
        %v714 = vpop.f32.mrb[0].mxu0
        %715 = vdwg.mxu0
        %716 = vst.msk [vmem:[%s300] sm:$0xff] %vm337, %v710
        %717 = vst.msk [vmem:[%s300 + $0x8] sm:$0xff] %vm337, %v713
        %s718 = sand.u32 %s142, 1
        %s719 = scalar_lea.sflag [#allocation5], %s718
        %s720 = sand.u32 %s142, 1
        %s721 = smul.addr %s720, 16
        %s722 = scalar_lea.vmem [#allocation12], %s721
        // Predicated region
        $region61: #{tpu_custom_call.1} parent=39 // pred_check
          %p723 = pneg %p152
        $region62: #{tpu_custom_call.1} parent=39 // pred_check_branch
          %725 = sbr.rel (%p723) target = $region64
        $region63: #{tpu_custom_call.1} parent=39 // pred_region
          %s727 = ssub.s32 256, 256
          %728 = vsyncadd %s719, %s727
          %s729 = smul.addr %s24, 2
          %s730 = smul.addr %s729, 128
          %s731 = scalar_lea.hbm %s5, %s730
          %s732 = sshll.u32 %s722, 4
          %s733 = int_to_ptr.vmem [resolvable:$true] %s732
          %738 = dma.vmem_to_hbm [thread:$0]  %s733, 256, %s731, %s719, 128, 128, 8
        $region64: #{tpu_custom_call.1} parent=39 // pred_fallthru
          _
      $region40: #{tpu_custom_call.1} parent=5 // pred_fallthru
        _
      %p739 = scmp.le.s32.totalorder 2, %s19
      // Predicated region
      $region65: #{tpu_custom_call.1} parent=5 // pred_check
        %p740 = pneg %p739
      $region66: #{tpu_custom_call.1} parent=5 // pred_check_branch
        %742 = sbr.rel (%p740) target = $region68
      $region67: #{tpu_custom_call.1} parent=5 // pred_region
        %s743 = ssub.s32 %s19, 2
        // Predicated region
        $region69: #{tpu_custom_call.1} parent=67 // pred_check
          %p744 = pneg %p158
        $region70: #{tpu_custom_call.1} parent=67 // pred_check_branch
          %746 = sbr.rel (%p744) target = $region72
        $region71: #{tpu_custom_call.1} parent=67 // pred_region
          %s747 = sand.u32 %s143, 1
          %s748 = scalar_lea.sflag [#allocation5], %s747
          %s749 = sand.u32 %s143, 1
          %s750 = smul.addr %s749, 16
          %s751 = scalar_lea.vmem [#allocation12], %s750
          %752 = dma.done %s748, 256
        $region72: #{tpu_custom_call.1} parent=67 // pred_fallthru
          _
      $region68: #{tpu_custom_call.1} parent=5 // pred_fallthru
        _
    $region6: #{tpu_custom_call.1} parent=1 // loop_footer
      %s23 = sadd.s32 1, %s19
    $region7: #{tpu_custom_call.1} parent=1 // loop_footer_branch
      %18 = sbr.rel target = $region3
    $region8: #{tpu_custom_call.1} parent=1 // loop_exit
      _
    %753 = vsyncpa [#allocation4], 1
    %s754 = scalar_lea.sflag [#allocation4], 1
    %755 = vsyncpa %s754, 1
    %756 = vsyncpa [#allocation7], 1
    %757 = vsyncpa [#allocation10], 1
    %758 = vsyncpa [#allocation5], 1
    %s759 = scalar_lea.sflag [#allocation5], 1
    %760 = vsyncpa %s759, 1

</llo_original>
